<compile_context>
chip_gen: v7x
topology: tpu7x:2x2x1
jax: 0.10.0
libtpu: 0.0.40
codegen_flags: <defaults>
</compile_context>

<pallas_src>
import functools
import math

import jax
import jax.numpy as jnp
from jax.experimental import pallas as pl
from jax.experimental.pallas import tpu as pltpu

_LANE = 128


def _round_up(n: int, m: int) -> int:
    return ((n + m - 1) // m) * m


def _cdiv(a: int, b: int) -> int:
    return (a + b - 1) // b


def _sincos_kernel(x_ref, w_ref, o_ref):
    # x_ref: (1, TB) f32   w_ref: (half, 1) f32   o_ref: (1 + 2*half, TB)
    half = w_ref.shape[0]
    x_row = x_ref[...]                                   # (1, TB)
    w_scaled = w_ref[...] * (2.0 * math.pi)              # (half, 1): scale the small vector once
    freqs = w_scaled * x_row                             # (half, TB) VPU broadcast multiply
    # All stores are lane-dense (full TB along lanes); only sublane offsets differ.
    o_ref[0:1, :] = x_row.astype(o_ref.dtype)
    o_ref[1:1 + half, :] = jnp.sin(freqs).astype(o_ref.dtype)
    o_ref[1 + half:, :] = jnp.cos(freqs).astype(o_ref.dtype)


def _choose_tiling(b: int, block_b: int):
    """Balanced batch tiling along the lane axis."""
    n_steps = max(1, _cdiv(b, block_b))
    # Give both v7x TensorCores a step when there is enough work to amortize
    # the ~0.35 us per-step overhead (no effect on single-TC v5e/v6e).
    if n_steps == 1 and b >= 2048:
        n_steps = 2
    tb = _round_up(_cdiv(b, n_steps), _LANE)
    b_pad = _round_up(b, tb)
    return tb, b_pad


@functools.partial(jax.jit, static_argnames=("block_b", "out_dtype"))
def random_or_learned_sinusoidal_pos_emb(x, weights, *, block_b=8192,
                                         out_dtype=jnp.float32):
    """x: (B,), weights: (half_dim,) -> (B, 1 + 2*half_dim), matching the PyTorch module."""
    assert x.ndim == 1 and weights.ndim == 1
    b = x.shape[0]
    half_dim = weights.shape[0]
    rows = 1 + 2 * half_dim

    x_f32 = x.astype(jnp.float32)
    w_col = weights.reshape(half_dim, 1).astype(jnp.float32)

    tb, b_pad = _choose_tiling(b, block_b)

    x_row = x_f32.reshape(1, b)
    if b_pad != b:
        x_row = jnp.pad(x_row, ((0, 0), (0, b_pad - b)))

    out_t = pl.pallas_call(
        _sincos_kernel,
        out_shape=jax.ShapeDtypeStruct((rows, b_pad), out_dtype),
        grid=(b_pad // tb,),
        in_specs=[
            pl.BlockSpec((1, tb), lambda i: (0, i)),          # x row, lane-tiled
            pl.BlockSpec((half_dim, 1), lambda i: (0, 0)),    # weight column, resident
        ],
        out_specs=pl.BlockSpec((rows, tb), lambda i: (0, i)),
        compiler_params=pltpu.CompilerParams(
            dimension_semantics=("parallel",)),
    )(x_row, w_col)

    # (rows, B_pad) -> (B, rows): layout plumbing; a fused downstream consumer
    # could take the transposed slab directly and skip this.
    return out_t[:, :b].T


def _reference(x, weights):
    x2d = x.reshape(-1, 1).astype(jnp.float32)
    freqs = x2d * weights.reshape(1, -1).astype(jnp.float32) * 2.0 * math.pi
    return jnp.concatenate([x2d, jnp.sin(freqs), jnp.cos(freqs)], axis=-1)


if __name__ == "__main__":
    key = jax.random.PRNGKey(0)
    kw, kx, kx2, kx3 = jax.random.split(key, 4)

    dim = 32                      # module's `dim` (must be even)
    half_dim = dim // 2
    batch = 8

    # Deterministic synthetic parameter (torch.randn(half_dim) equivalent).
    weights = jax.random.normal(kw, (half_dim,), dtype=jnp.float32)
    # Example input: a batch of scalar timesteps.
    x = jax.random.normal(kx, (batch,), dtype=jnp.float32)

    out = jax.block_until_ready(random_or_learned_sinusoidal_pos_emb(x, weights))
    ref = _reference(x, weights)
    assert out.shape == (batch, dim + 1), out.shape
    assert jnp.allclose(out, ref, atol=1e-5, rtol=1e-5), "mismatch vs reference"

    # Ragged batch (exercises lane padding, B % 128 != 0).
    x_ragged = jax.random.normal(kx2, (13,), dtype=jnp.float32)
    out_r = jax.block_until_ready(
        random_or_learned_sinusoidal_pos_emb(x_ragged, weights))
    ref_r = _reference(x_ragged, weights)
    assert out_r.shape == (13, dim + 1), out_r.shape
    assert jnp.allclose(out_r, ref_r, atol=1e-5, rtol=1e-5), "ragged mismatch"

    # Larger ragged batch with a small block_b to exercise a multi-step grid
    # and the balanced-tile padding policy.
    x_big = jax.random.normal(kx3, (1000,), dtype=jnp.float32)
    out_b = jax.block_until_ready(
        random_or_learned_sinusoidal_pos_emb(x_big, weights, block_b=256))
    ref_b = _reference(x_big, weights)
    assert out_b.shape == (1000, dim + 1), out_b.shape
    assert jnp.allclose(out_b, ref_b, atol=1e-5, rtol=1e-5), "multi-tile mismatch"

    print("KERNEL_OK")
</pallas_src>

<mosaic_0001>
module attributes {stable_mosaic.version = 11 : i64} {
  func.func @_sincos_kernel(%arg0: i32, %arg1: memref<1x128xf32, #tpu.memory_space<vmem>>, %arg2: memref<16x1xf32, #tpu.memory_space<vmem>>, %arg3: memref<33x128xf32, #tpu.memory_space<vmem>>) attributes {dimension_semantics = [#tpu.dimension_semantics<parallel>], iteration_bounds = array<i64: 1>, scalar_prefetch = 0 : i64, scratch_operands = 0 : i64, tpu.core_type = #tpu.core_type<tc>, window_params = [{transform_indices = @transform_0, window_bounds = array<i64: 1, 128>}, {pipeline_mode = #tpu.pipeline_mode<synchronous>, transform_indices = @transform_1, window_bounds = array<i64: 16, 1>}, {transform_indices = @transform_2, window_bounds = array<i64: 33, 128>}]} {
    %c0 = arith.constant 0 : index
    %c0_0 = arith.constant 0 : index
    %0 = vector.load %arg1[%c0, %c0_0] : memref<1x128xf32, #tpu.memory_space<vmem>>, vector<1x128xf32>
    %c0_1 = arith.constant 0 : index
    %c0_2 = arith.constant 0 : index
    %1 = vector.load %arg2[%c0_1, %c0_2] : memref<16x1xf32, #tpu.memory_space<vmem>>, vector<16x1xf32>
    %cst = arith.constant 6.28318548 : f32
    %2 = vector.broadcast %cst : f32 to vector<16x1xf32>
    %3 = arith.mulf %1, %2 : vector<16x1xf32>
    %4 = vector.broadcast %3 : vector<16x1xf32> to vector<16x128xf32>
    %5 = vector.broadcast %0 : vector<1x128xf32> to vector<16x128xf32>
    %6 = arith.mulf %4, %5 : vector<16x128xf32>
    %c0_3 = arith.constant 0 : index
    %c0_4 = arith.constant 0 : index
    %7 = vector.load %arg3[%c0_3, %c0_4] : memref<33x128xf32, #tpu.memory_space<vmem>>, vector<1x128xf32>
    tpu.vector_store %arg3[%c0_3, %c0_4], %0 {strides = array<i32>} : memref<33x128xf32, #tpu.memory_space<vmem>>, vector<1x128xf32>,
    %8 = math.sin %6 : vector<16x128xf32>
    %c1 = arith.constant 1 : index
    %c0_5 = arith.constant 0 : index
    %9 = vector.load %arg3[%c1, %c0_5] : memref<33x128xf32, #tpu.memory_space<vmem>>, vector<16x128xf32>
    tpu.vector_store %arg3[%c1, %c0_5], %8 {strides = array<i32>} : memref<33x128xf32, #tpu.memory_space<vmem>>, vector<16x128xf32>,
    %10 = math.cos %6 : vector<16x128xf32>
    %c17 = arith.constant 17 : index
    %c0_6 = arith.constant 0 : index
    %11 = vector.load %arg3[%c17, %c0_6] : memref<33x128xf32, #tpu.memory_space<vmem>>, vector<16x128xf32>
    tpu.vector_store %arg3[%c17, %c0_6], %10 {strides = array<i32>} : memref<33x128xf32, #tpu.memory_space<vmem>>, vector<16x128xf32>,
    return
  }
  func.func @transform_0(%arg0: i32) -> (i32, i32) {
    %c0_i32 = arith.constant 0 : i32
    %c0_i32_0 = arith.constant 0 : i32
    return %c0_i32, %arg0 : i32, i32
  }
  func.func @transform_1(%arg0: i32) -> (i32, i32) {
    %c0_i32 = arith.constant 0 : i32
    %c0_i32_0 = arith.constant 0 : i32
    %c0_i32_1 = arith.constant 0 : i32
    return %c0_i32, %c0_i32_0 : i32, i32
  }
  func.func @transform_2(%arg0: i32) -> (i32, i32) {
    %c0_i32 = arith.constant 0 : i32
    %c0_i32_0 = arith.constant 0 : i32
    return %c0_i32, %arg0 : i32, i32
  }
}

</mosaic_0001>

<llo_original>
// kernel: random_or_learned_sinusoidal_pos_emb.1
$region0: #{random_or_learned_sinusoidal_pos_emb.1}
  #allocation0 [shape = 'u32[]', space=smem, size = 0x4, offset = 0x4, fixed_abs, tag = 'smem constant byte address 0x4 - core index']
  #allocation1 [shape = 'u32[144,128]{1,0:T(1,128)}', space=vmem, size = 0x12000, scoped, tag = 'internal scratch']
  %s0 = inlined_call_operand.vmem [shape: f32[1,128], index: 0, kind: input, shape index: {}]
  %s1 = inlined_call_operand.vmem [shape: f32[16,1], index: 1, kind: input, shape index: {}]
  %s2 = inlined_call_operand.vmem [shape: f32[33,128], index: 2, kind: output, shape index: {}]
  %s3 = sld [smem:[#allocation0]]
  $region18: #{random_or_learned_sinusoidal_pos_emb.1} parent=0
    _
  %s5 = ssub.s32 1, %s3
  %s6 = scalar_select 0, %s5, %s3
  // Predicated region
  $region2: #{random_or_learned_sinusoidal_pos_emb.1} parent=0 // pred_check
    _
  $region3: #{random_or_learned_sinusoidal_pos_emb.1} parent=0 // pred_check_branch
    %8 = sbr.rel (0) target = $region5
  $region4: #{random_or_learned_sinusoidal_pos_emb.1} parent=0 // pred_region
    _
  $region5: #{random_or_learned_sinusoidal_pos_emb.1} parent=0 // pred_fallthru
    _
  // Predicated region
  $region6: #{random_or_learned_sinusoidal_pos_emb.1} parent=0 // pred_check
    _
  $region7: #{random_or_learned_sinusoidal_pos_emb.1} parent=0 // pred_check_branch
    %10 = sbr.rel (0) target = $region9
  $region8: #{random_or_learned_sinusoidal_pos_emb.1} parent=0 // pred_region
    _
  $region9: #{random_or_learned_sinusoidal_pos_emb.1} parent=0 // pred_fallthru
    _
  %v11 = vld [vmem:[%s0] sm:$0x1]
  %v12 = vld [vmem:[%s1] sm:$0xff]
  %v13 = vld [vmem:[%s1 + $0x8] sm:$0xff]
  %v14 = vmul.f32 %v12, 6.2831855
  %v15 = vmul.f32 %v13, 6.2831855
  %17 = vset.pattern.permute.xlu0 0
  %18 = vperm.xlu0 %17, %v14
  %v19 = vpop.permute.xlu0 %18
  %22 = vset.pattern.permute.xlu0 0
  %23 = vperm.xlu0 %22, %v15
  %v24 = vpop.permute.xlu0 %23
  %v27 = vlaneseq
  %v28 = vshrl.u32 %v27, 7
  %v29 = vsub.s32 0, %v28
  %v30 = vrot.slane %v11, %v29
  %v32 = vmul.f32 %v19, %v30
  %v33 = vmul.f32 %v24, %v30
  %34 = vst [vmem:[%s2] sm:$0x1] %v11
  %v35 = vand.u32 2147483647, %v32
  %vm36 = vcmp.le.f32.partialorder %v35, 0.7853982
  %vm37 = vcmp.lt.s32.totalorder %v32, 0
  %v38 = vand.u32 %v32, 2139095040
  %v39 = vshrl.u32 %v38, 23
  %v40 = vsub.s32 %v39, 127
  %v41 = vand.u32 2147483647, %v32
  %v42 = vand.u32 %v41, 8388607
  %v43 = vor.u32 %v42, 8388608
  %v44 = vsub.s32 0, %v43
  %v45 = vadd.s32 %v40, 1
  %vm46 = vcmp.gt.s32.totalorder %v45, 0
  %v47 = vsel %vm46, %v45, 0
  %v48 = vshrl.u32 %v47, 5
  %v49 = vand.u32 %v47, 31
  %v50 = vsub.s32 32, %v49
  %v51 = vshrl.u32 683565275, %v50
  %v52 = vshll.u32 683565275, %v49
  %v53 = vshrl.u32 2475754826, %v50
  %v54 = vor.u32 %v52, %v53
  %v55 = vshll.u32 2475754826, %v49
  %v56 = vshrl.u32 2131351028, %v50
  %v57 = vor.u32 %v55, %v56
  %v58 = vshll.u32 2131351028, %v49
  %v59 = vshrl.u32 2102212464, %v50
  %v60 = vor.u32 %v58, %v59
  %v61 = vshll.u32 2102212464, %v49
  %v62 = vshrl.u32 920167782, %v50
  %v63 = vor.u32 %v61, %v62
  %v64 = vshll.u32 920167782, %v49
  %v65 = vshrl.u32 1326507024, %v50
  %v66 = vor.u32 %v64, %v65
  %vm67 = vcmp.lt.s32.totalorder %v48, 1
  %vm68 = vcmp.lt.s32.totalorder %v48, 2
  %vm69 = vcmp.lt.s32.totalorder %v48, 3
  %vm70 = vcmp.lt.s32.totalorder %v48, 4
  %v71 = vsel %vm67, %v51, %v54
  %v72 = vsel %vm70, %v60, 2102212464
  %v73 = vsel %vm69, %v57, %v72
  %v74 = vsel %vm68, %v71, %v73
  %v75 = vsel %vm67, %v54, %v57
  %v76 = vsel %vm70, %v63, 920167782
  %v77 = vsel %vm69, %v60, %v76
  %v78 = vsel %vm68, %v75, %v77
  %v79 = vsel %vm67, %v57, %v60
  %v80 = vsel %vm70, %v66, 1326507024
  %v81 = vsel %vm69, %v63, %v80
  %v82 = vsel %vm68, %v79, %v81
  %v83 = vshll.u32 %v43, 8
  %v84 = vmul.u32.u64.compose %v83, %v82
  %v85 = vextract.low.u32 %v84
  %v86 = vextract.high.u32 %v84
  %v87 = vmul.u32.u64.compose %v83, %v78
  %v88 = vextract.low.u32 %v87
  %v89 = vextract.high.u32 %v87
  %v90 = vmul.u32 %v83, %v74
  %v91 = vadd.s32 %v86, %v88
  %vm92 = vc.u32 %v86, %v88
  %v93 = vadd.s32 %v89, 1
  %v94 = vsel %vm92, %v93, %v89
  %v95 = vadd.s32 %v90, %v94
  %v96 = vadd.s32 %v95, 536870912
  %v97 = vshrl.u32 %v96, 30
  %v98 = vshll.u32 %v97, 30
  %v99 = vsub.s32 %v95, %v98
  %vm100 = vcmp.lt.s32.totalorder %v99, 0
  %v101 = vsub.s32 0, %v99
  %v102 = vsel %vm100, %v101, %v99
  %v103 = vclz %v102
  %v104 = vsub.s32 %v103, 2
  %vm105 = vcmp.gt.s32.totalorder 0, %v104
  %v106 = vsel %vm105, 0, %v104
  %v107 = vsub.s32 32, %v106
  %v108 = vshll.u32 %v99, %v106
  %v109 = vshrl.u32 %v91, %v107
  %v110 = vor.u32 %v108, %v109
  %v111 = vsub.s32 4294967266, %v106
  %v112 = vadd.s32 %v111, 127
  %v113 = vshll.u32 %v112, 23
  %v114 = vor.u32 4788187, %v113
  %v115 = vand.u32 2147483647, %v114
  %v117 = vcvt.s32.f32 %v110
  %v118 = vmul.f32 %v117, %v115
  %v119 = vxor.u32 %v118, 2147483648
  %v120 = vsel %vm37, %v119, %v118
  %v121 = vsub.s32 4, %v97
  %v122 = vsel %vm37, %v121, %v97
  %v123 = vsel %vm36, %v32, %v120
  %v124 = vsel %vm36, 0, %v122
  %v125 = vcosq.f32.pop %v123
  %v126 = vsinq.f32.pop %v123
  %vm127 = vweird.f32 %v32
  %v128 = vadd.s32 %v124, 3
  %v129 = vand.u32 %v128, 3
  %vm130 = vcmp.lt.s32.totalorder %v129, 2
  %vm131 = vcmp.eq.s32.totalorder %v129, 0
  %v132 = vxor.u32 %v126, 2147483648
  %v133 = vsel %vm131, %v125, %v132
  %vm134 = vcmp.eq.s32.totalorder %v129, 2
  %v135 = vxor.u32 %v125, 2147483648
  %v136 = vsel %vm134, %v135, %v126
  %v137 = vsel %vm130, %v133, %v136
  %v138 = vsel %vm127, nan, %v137
  %v139 = vand.u32 2147483647, %v33
  %vm140 = vcmp.le.f32.partialorder %v139, 0.7853982
  %vm141 = vcmp.lt.s32.totalorder %v33, 0
  %v142 = vand.u32 %v33, 2139095040
  %v143 = vshrl.u32 %v142, 23
  %v144 = vsub.s32 %v143, 127
  %v145 = vand.u32 2147483647, %v33
  %v146 = vand.u32 %v145, 8388607
  %v147 = vor.u32 %v146, 8388608
  %v148 = vsub.s32 0, %v147
  %v149 = vadd.s32 %v144, 1
  %vm150 = vcmp.gt.s32.totalorder %v149, 0
  %v151 = vsel %vm150, %v149, 0
  %v152 = vshrl.u32 %v151, 5
  %v153 = vand.u32 %v151, 31
  %v154 = vsub.s32 32, %v153
  %v155 = vshrl.u32 683565275, %v154
  %v156 = vshll.u32 683565275, %v153
  %v157 = vshrl.u32 2475754826, %v154
  %v158 = vor.u32 %v156, %v157
  %v159 = vshll.u32 2475754826, %v153
  %v160 = vshrl.u32 2131351028, %v154
  %v161 = vor.u32 %v159, %v160
  %v162 = vshll.u32 2131351028, %v153
  %v163 = vshrl.u32 2102212464, %v154
  %v164 = vor.u32 %v162, %v163
  %v165 = vshll.u32 2102212464, %v153
  %v166 = vshrl.u32 920167782, %v154
  %v167 = vor.u32 %v165, %v166
  %v168 = vshll.u32 920167782, %v153
  %v169 = vshrl.u32 1326507024, %v154
  %v170 = vor.u32 %v168, %v169
  %vm171 = vcmp.lt.s32.totalorder %v152, 1
  %vm172 = vcmp.lt.s32.totalorder %v152, 2
  %vm173 = vcmp.lt.s32.totalorder %v152, 3
  %vm174 = vcmp.lt.s32.totalorder %v152, 4
  %v175 = vsel %vm171, %v155, %v158
  %v176 = vsel %vm174, %v164, 2102212464
  %v177 = vsel %vm173, %v161, %v176
  %v178 = vsel %vm172, %v175, %v177
  %v179 = vsel %vm171, %v158, %v161
  %v180 = vsel %vm174, %v167, 920167782
  %v181 = vsel %vm173, %v164, %v180
  %v182 = vsel %vm172, %v179, %v181
  %v183 = vsel %vm171, %v161, %v164
  %v184 = vsel %vm174, %v170, 1326507024
  %v185 = vsel %vm173, %v167, %v184
  %v186 = vsel %vm172, %v183, %v185
  %v187 = vshll.u32 %v147, 8
  %v188 = vmul.u32.u64.compose %v187, %v186
  %v189 = vextract.low.u32 %v188
  %v190 = vextract.high.u32 %v188
  %v191 = vmul.u32.u64.compose %v187, %v182
  %v192 = vextract.low.u32 %v191
  %v193 = vextract.high.u32 %v191
  %v194 = vmul.u32 %v187, %v178
  %v195 = vadd.s32 %v190, %v192
  %vm196 = vc.u32 %v190, %v192
  %v197 = vadd.s32 %v193, 1
  %v198 = vsel %vm196, %v197, %v193
  %v199 = vadd.s32 %v194, %v198
  %v200 = vadd.s32 %v199, 536870912
  %v201 = vshrl.u32 %v200, 30
  %v202 = vshll.u32 %v201, 30
  %v203 = vsub.s32 %v199, %v202
  %vm204 = vcmp.lt.s32.totalorder %v203, 0
  %v205 = vsub.s32 0, %v203
  %v206 = vsel %vm204, %v205, %v203
  %v207 = vclz %v206
  %v208 = vsub.s32 %v207, 2
  %vm209 = vcmp.gt.s32.totalorder 0, %v208
  %v210 = vsel %vm209, 0, %v208
  %v211 = vsub.s32 32, %v210
  %v212 = vshll.u32 %v203, %v210
  %v213 = vshrl.u32 %v195, %v211
  %v214 = vor.u32 %v212, %v213
  %v215 = vsub.s32 4294967266, %v210
  %v216 = vadd.s32 %v215, 127
  %v217 = vshll.u32 %v216, 23
  %v218 = vor.u32 4788187, %v217
  %v219 = vand.u32 2147483647, %v218
  %v221 = vcvt.s32.f32 %v214
  %v222 = vmul.f32 %v221, %v219
  %v223 = vxor.u32 %v222, 2147483648
  %v224 = vsel %vm141, %v223, %v222
  %v225 = vsub.s32 4, %v201
  %v226 = vsel %vm141, %v225, %v201
  %v227 = vsel %vm140, %v33, %v224
  %v228 = vsel %vm140, 0, %v226
  %v229 = vcosq.f32.pop %v227
  %v230 = vsinq.f32.pop %v227
  %vm231 = vweird.f32 %v33
  %v232 = vadd.s32 %v228, 3
  %v233 = vand.u32 %v232, 3
  %vm234 = vcmp.lt.s32.totalorder %v233, 2
  %vm235 = vcmp.eq.s32.totalorder %v233, 0
  %v236 = vxor.u32 %v230, 2147483648
  %v237 = vsel %vm235, %v229, %v236
  %vm238 = vcmp.eq.s32.totalorder %v233, 2
  %v239 = vxor.u32 %v229, 2147483648
  %v240 = vsel %vm238, %v239, %v230
  %v241 = vsel %vm234, %v237, %v240
  %v242 = vsel %vm231, nan, %v241
  %243 = vst [vmem:[%s2 + $0x1] sm:$0xff] %v138
  %244 = vst [vmem:[%s2 + $0x9] sm:$0xff] %v242
  %v245 = vand.u32 2147483647, %v32
  %vm246 = vcmp.le.f32.partialorder %v245, 0.7853982
  %vm247 = vcmp.lt.s32.totalorder %v32, 0
  %v248 = vand.u32 %v32, 2139095040
  %v249 = vshrl.u32 %v248, 23
  %v250 = vsub.s32 %v249, 127
  %v251 = vand.u32 2147483647, %v32
  %v252 = vand.u32 %v251, 8388607
  %v253 = vor.u32 %v252, 8388608
  %v254 = vsub.s32 0, %v253
  %v255 = vadd.s32 %v250, 1
  %vm256 = vcmp.gt.s32.totalorder %v255, 0
  %v257 = vsel %vm256, %v255, 0
  %v258 = vshrl.u32 %v257, 5
  %v259 = vand.u32 %v257, 31
  %v260 = vsub.s32 32, %v259
  %v261 = vshrl.u32 683565275, %v260
  %v262 = vshll.u32 683565275, %v259
  %v263 = vshrl.u32 2475754826, %v260
  %v264 = vor.u32 %v262, %v263
  %v265 = vshll.u32 2475754826, %v259
  %v266 = vshrl.u32 2131351028, %v260
  %v267 = vor.u32 %v265, %v266
  %v268 = vshll.u32 2131351028, %v259
  %v269 = vshrl.u32 2102212464, %v260
  %v270 = vor.u32 %v268, %v269
  %v271 = vshll.u32 2102212464, %v259
  %v272 = vshrl.u32 920167782, %v260
  %v273 = vor.u32 %v271, %v272
  %v274 = vshll.u32 920167782, %v259
  %v275 = vshrl.u32 1326507024, %v260
  %v276 = vor.u32 %v274, %v275
  %vm277 = vcmp.lt.s32.totalorder %v258, 1
  %vm278 = vcmp.lt.s32.totalorder %v258, 2
  %vm279 = vcmp.lt.s32.totalorder %v258, 3
  %vm280 = vcmp.lt.s32.totalorder %v258, 4
  %v281 = vsel %vm277, %v261, %v264
  %v282 = vsel %vm280, %v270, 2102212464
  %v283 = vsel %vm279, %v267, %v282
  %v284 = vsel %vm278, %v281, %v283
  %v285 = vsel %vm277, %v264, %v267
  %v286 = vsel %vm280, %v273, 920167782
  %v287 = vsel %vm279, %v270, %v286
  %v288 = vsel %vm278, %v285, %v287
  %v289 = vsel %vm277, %v267, %v270
  %v290 = vsel %vm280, %v276, 1326507024
  %v291 = vsel %vm279, %v273, %v290
  %v292 = vsel %vm278, %v289, %v291
  %v293 = vshll.u32 %v253, 8
  %v294 = vmul.u32.u64.compose %v293, %v292
  %v295 = vextract.low.u32 %v294
  %v296 = vextract.high.u32 %v294
  %v297 = vmul.u32.u64.compose %v293, %v288
  %v298 = vextract.low.u32 %v297
  %v299 = vextract.high.u32 %v297
  %v300 = vmul.u32 %v293, %v284
  %v301 = vadd.s32 %v296, %v298
  %vm302 = vc.u32 %v296, %v298
  %v303 = vadd.s32 %v299, 1
  %v304 = vsel %vm302, %v303, %v299
  %v305 = vadd.s32 %v300, %v304
  %v306 = vadd.s32 %v305, 536870912
  %v307 = vshrl.u32 %v306, 30
  %v308 = vshll.u32 %v307, 30
  %v309 = vsub.s32 %v305, %v308
  %vm310 = vcmp.lt.s32.totalorder %v309, 0
  %v311 = vsub.s32 0, %v309
  %v312 = vsel %vm310, %v311, %v309
  %v313 = vclz %v312
  %v314 = vsub.s32 %v313, 2
  %vm315 = vcmp.gt.s32.totalorder 0, %v314
  %v316 = vsel %vm315, 0, %v314
  %v317 = vsub.s32 32, %v316
  %v318 = vshll.u32 %v309, %v316
  %v319 = vshrl.u32 %v301, %v317
  %v320 = vor.u32 %v318, %v319
  %v321 = vsub.s32 4294967266, %v316
  %v322 = vadd.s32 %v321, 127
  %v323 = vshll.u32 %v322, 23
  %v324 = vor.u32 4788187, %v323
  %v325 = vand.u32 2147483647, %v324
  %v327 = vcvt.s32.f32 %v320
  %v328 = vmul.f32 %v327, %v325
  %v329 = vxor.u32 %v328, 2147483648
  %v330 = vsel %vm247, %v329, %v328
  %v331 = vsub.s32 4, %v307
  %v332 = vsel %vm247, %v331, %v307
  %v333 = vsel %vm246, %v32, %v330
  %v334 = vsel %vm246, 0, %v332
  %v335 = vcosq.f32.pop %v333
  %v336 = vsinq.f32.pop %v333
  %vm337 = vweird.f32 %v32
  %v338 = vand.u32 %v334, 3
  %vm339 = vcmp.lt.s32.totalorder %v338, 2
  %vm340 = vcmp.eq.s32.totalorder %v338, 0
  %v341 = vxor.u32 %v336, 2147483648
  %v342 = vsel %vm340, %v335, %v341
  %vm343 = vcmp.eq.s32.totalorder %v338, 2
  %v344 = vxor.u32 %v335, 2147483648
  %v345 = vsel %vm343, %v344, %v336
  %v346 = vsel %vm339, %v342, %v345
  %v347 = vsel %vm337, nan, %v346
  %v348 = vand.u32 2147483647, %v33
  %vm349 = vcmp.le.f32.partialorder %v348, 0.7853982
  %vm350 = vcmp.lt.s32.totalorder %v33, 0
  %v351 = vand.u32 %v33, 2139095040
  %v352 = vshrl.u32 %v351, 23
  %v353 = vsub.s32 %v352, 127
  %v354 = vand.u32 2147483647, %v33
  %v355 = vand.u32 %v354, 8388607
  %v356 = vor.u32 %v355, 8388608
  %v357 = vsub.s32 0, %v356
  %v358 = vadd.s32 %v353, 1
  %vm359 = vcmp.gt.s32.totalorder %v358, 0
  %v360 = vsel %vm359, %v358, 0
  %v361 = vshrl.u32 %v360, 5
  %v362 = vand.u32 %v360, 31
  %v363 = vsub.s32 32, %v362
  %v364 = vshrl.u32 683565275, %v363
  %v365 = vshll.u32 683565275, %v362
  %v366 = vshrl.u32 2475754826, %v363
  %v367 = vor.u32 %v365, %v366
  %v368 = vshll.u32 2475754826, %v362
  %v369 = vshrl.u32 2131351028, %v363
  %v370 = vor.u32 %v368, %v369
  %v371 = vshll.u32 2131351028, %v362
  %v372 = vshrl.u32 2102212464, %v363
  %v373 = vor.u32 %v371, %v372
  %v374 = vshll.u32 2102212464, %v362
  %v375 = vshrl.u32 920167782, %v363
  %v376 = vor.u32 %v374, %v375
  %v377 = vshll.u32 920167782, %v362
  %v378 = vshrl.u32 1326507024, %v363
  %v379 = vor.u32 %v377, %v378
  %vm380 = vcmp.lt.s32.totalorder %v361, 1
  %vm381 = vcmp.lt.s32.totalorder %v361, 2
  %vm382 = vcmp.lt.s32.totalorder %v361, 3
  %vm383 = vcmp.lt.s32.totalorder %v361, 4
  %v384 = vsel %vm380, %v364, %v367
  %v385 = vsel %vm383, %v373, 2102212464
  %v386 = vsel %vm382, %v370, %v385
  %v387 = vsel %vm381, %v384, %v386
  %v388 = vsel %vm380, %v367, %v370
  %v389 = vsel %vm383, %v376, 920167782
  %v390 = vsel %vm382, %v373, %v389
  %v391 = vsel %vm381, %v388, %v390
  %v392 = vsel %vm380, %v370, %v373
  %v393 = vsel %vm383, %v379, 1326507024
  %v394 = vsel %vm382, %v376, %v393
  %v395 = vsel %vm381, %v392, %v394
  %v396 = vshll.u32 %v356, 8
  %v397 = vmul.u32.u64.compose %v396, %v395
  %v398 = vextract.low.u32 %v397
  %v399 = vextract.high.u32 %v397
  %v400 = vmul.u32.u64.compose %v396, %v391
  %v401 = vextract.low.u32 %v400
  %v402 = vextract.high.u32 %v400
  %v403 = vmul.u32 %v396, %v387
  %v404 = vadd.s32 %v399, %v401
  %vm405 = vc.u32 %v399, %v401
  %v406 = vadd.s32 %v402, 1
  %v407 = vsel %vm405, %v406, %v402
  %v408 = vadd.s32 %v403, %v407
  %v409 = vadd.s32 %v408, 536870912
  %v410 = vshrl.u32 %v409, 30
  %v411 = vshll.u32 %v410, 30
  %v412 = vsub.s32 %v408, %v411
  %vm413 = vcmp.lt.s32.totalorder %v412, 0
  %v414 = vsub.s32 0, %v412
  %v415 = vsel %vm413, %v414, %v412
  %v416 = vclz %v415
  %v417 = vsub.s32 %v416, 2
  %vm418 = vcmp.gt.s32.totalorder 0, %v417
  %v419 = vsel %vm418, 0, %v417
  %v420 = vsub.s32 32, %v419
  %v421 = vshll.u32 %v412, %v419
  %v422 = vshrl.u32 %v404, %v420
  %v423 = vor.u32 %v421, %v422
  %v424 = vsub.s32 4294967266, %v419
  %v425 = vadd.s32 %v424, 127
  %v426 = vshll.u32 %v425, 23
  %v427 = vor.u32 4788187, %v426
  %v428 = vand.u32 2147483647, %v427
  %v430 = vcvt.s32.f32 %v423
  %v431 = vmul.f32 %v430, %v428
  %v432 = vxor.u32 %v431, 2147483648
  %v433 = vsel %vm350, %v432, %v431
  %v434 = vsub.s32 4, %v410
  %v435 = vsel %vm350, %v434, %v410
  %v436 = vsel %vm349, %v33, %v433
  %v437 = vsel %vm349, 0, %v435
  %v438 = vcosq.f32.pop %v436
  %v439 = vsinq.f32.pop %v436
  %vm440 = vweird.f32 %v33
  %v441 = vand.u32 %v437, 3
  %vm442 = vcmp.lt.s32.totalorder %v441, 2
  %vm443 = vcmp.eq.s32.totalorder %v441, 0
  %v444 = vxor.u32 %v439, 2147483648
  %v445 = vsel %vm443, %v438, %v444
  %vm446 = vcmp.eq.s32.totalorder %v441, 2
  %v447 = vxor.u32 %v438, 2147483648
  %v448 = vsel %vm446, %v447, %v439
  %v449 = vsel %vm442, %v445, %v448
  %v450 = vsel %vm440, nan, %v449
  %451 = vst [vmem:[%s2 + $0x11] sm:$0xff] %v347
  %452 = vst [vmem:[%s2 + $0x19] sm:$0xff] %v450
  // Predicated region
  $region10: #{random_or_learned_sinusoidal_pos_emb.1} parent=0 // pred_check
    _
  $region11: #{random_or_learned_sinusoidal_pos_emb.1} parent=0 // pred_check_branch
    %454 = sbr.rel (0) target = $region13
  $region12: #{random_or_learned_sinusoidal_pos_emb.1} parent=0 // pred_region
    _
  $region13: #{random_or_learned_sinusoidal_pos_emb.1} parent=0 // pred_fallthru
    _
  // Predicated region
  $region14: #{random_or_learned_sinusoidal_pos_emb.1} parent=0 // pred_check
    _
  $region15: #{random_or_learned_sinusoidal_pos_emb.1} parent=0 // pred_check_branch
    %456 = sbr.rel (0) target = $region17
  $region16: #{random_or_learned_sinusoidal_pos_emb.1} parent=0 // pred_region
    _
  $region17: #{random_or_learned_sinusoidal_pos_emb.1} parent=0 // pred_fallthru
    _

</llo_original>
